<compile_context>
chip_gen: v6e
topology: v6e:2x2x1
jax: 0.10.0
libtpu: 0.0.40
codegen_flags: <defaults>
</compile_context>

<pallas_src>
import jax
import jax.numpy as jnp
from jax.experimental import pallas as pl
from jax.experimental.pallas import tpu as pltpu


def _hbm_copy_kernel(x_hbm, o_hbm, sem):
    # One whole-array HBM -> HBM DMA: no VMEM staging, no vector load/store.
    cp = pltpu.make_async_copy(x_hbm, o_hbm, sem)
    cp.start()
    cp.wait()


def materialize_identity_copy(x):
    """Optional utility: materialize a fresh HBM copy of `x` via a single DMA.

    Only for callers that genuinely need a new buffer; the Classifier forward
    itself never calls this (the reference forward is a no-op).
    """
    nbytes = x.size * jnp.dtype(x.dtype).itemsize
    return pl.pallas_call(
        _hbm_copy_kernel,
        out_shape=jax.ShapeDtypeStruct(x.shape, x.dtype),
        in_specs=[pl.BlockSpec(memory_space=pl.ANY)],
        out_specs=pl.BlockSpec(memory_space=pl.ANY),
        scratch_shapes=[pltpu.SemaphoreType.DMA(())],
        # Advisory for XLA's scheduler: pure memory traffic (read + write).
        cost_estimate=pl.CostEstimate(
            flops=0, transcendentals=0, bytes_accessed=2 * nbytes),
    )(x)


def classifier_forward(*inputs):
    """Pallas equivalent of Classifier.forward.

    The PyTorch forward body is `pass`: it performs no computation and returns
    None.  The faithful (and fastest) translation is therefore to do nothing —
    no pallas_call, no HBM read/write (review item #1).  Callers that want the
    input "passed through" should keep using their own `x` unchanged; callers
    that must materialize a copy can use `materialize_identity_copy`.
    """
    return None


if __name__ == "__main__":
    key = jax.random.PRNGKey(0)
    # Small NCHW input consistent with a classifier-style module.
    x = jax.random.normal(key, (2, 4, 16, 16), dtype=jnp.float32)

    # 1) The actual module forward: a no-op, exactly like the PyTorch `pass`.
    out = classifier_forward(x)
    assert out is None

    # 2) Exercise the Pallas DMA-copy kernel once so the script runs a real
    #    pallas_call on TPU.
    y = materialize_identity_copy(x)
    jax.block_until_ready(y)

    # Sanity check: exact shape/dtype/value preservation (no aliasing, so the
    # comparison against x is safe).
    assert y.shape == x.shape and y.dtype == x.dtype
    assert bool(jnp.allclose(y, x))

    print("KERNEL_OK")
</pallas_src>

<mosaic_0001>
module attributes {stable_mosaic.version = 11 : i64} {
  func.func @_hbm_copy_kernel(%arg0: memref<2x4x16x16xf32, #tpu.memory_space<any>>, %arg1: memref<2x4x16x16xf32, #tpu.memory_space<any>>, %arg2: memref<!tpu.dma_semaphore, #tpu.memory_space<semaphore_mem>>) attributes {dimension_semantics = [], scalar_prefetch = 0 : i64, scratch_operands = 1 : i64, tpu.core_type = #tpu.core_type<tc>} {
    tpu.enqueue_dma source(%arg0 : memref<2x4x16x16xf32, #tpu.memory_space<any>>) target(%arg1 : memref<2x4x16x16xf32, #tpu.memory_space<any>>) target_semaphore(%arg2 : memref<!tpu.dma_semaphore, #tpu.memory_space<semaphore_mem>>)
    tpu.wait_dma2 semaphore(%arg2 : memref<!tpu.dma_semaphore, #tpu.memory_space<semaphore_mem>>) src(%arg0 : memref<2x4x16x16xf32, #tpu.memory_space<any>>) dst(%arg1 : memref<2x4x16x16xf32, #tpu.memory_space<any>>)
    return
  }
}

</mosaic_0001>

<llo_original>
// kernel: tpu_custom_call.1
$region0: #{tpu_custom_call.1}
  #allocation0 [shape = 'u32[]', space=smem, size = 0x4, offset = 0x4, fixed_abs, tag = 'smem constant byte address 0x4 - core index']
  #allocation1 [shape = 'u32[144,128]{1,0:T(1,128)}', space=vmem, size = 0x12000, scoped, tag = 'internal scratch']
  #allocation2 [shape = 's32[1]{0}', space=sflag, size = 0x4, scoped, tag = 'scratch operand']
  #allocation3 [shape = 's32[]', space=sflag, size = 0x4, offset = 0, fixed_abs, tag = 'sflag constant byte address 0x0 - dummy sync flag']
  #allocation4 [shape = 'u32[0]{0}', space=smem, size = 0, offset = 0, fixed_abs, tag = 'smem constant byte address 0x0 - null']
  %s0 = inlined_call_operand.hbm [shape: f32[2,4,16,16], index: 0, kind: input, shape index: {}]
  %s1 = inlined_call_operand.hbm [shape: f32[2,4,16,16], index: 1, kind: output, shape index: {}]
  %s2 = sld [smem:[#allocation0]]
  $region2: #{tpu_custom_call.1} parent=0
    _
  %s4 = ssub.s32 1, %s2
  %s5 = scalar_select 0, %s4, %s2
  %s7 = sshll.u32 1, 14
  %s8 = sxor.u32 4294967295, %s7
  %12 = dma.general %s0, 2048, %s1, [#allocation2], 131072, [#allocation4], 0, 0
  %s13 = smul.u32 2, 4
  %s14 = smul.u32 %s13, 16
  %s15 = smul.u32 %s14, 1
  %s16 = sshll.u32 %s15, 4
  %17 = dma.done [#allocation2], %s16
  %18 = vsyncmov [#allocation2]
  %s19 = vpop.sfrf %18
  %p20 = scmp.eq.s32.totalorder %s19, 0
  %p21 = pneg %p20
  %23 = shalt.err (%p21)

</llo_original>
